<compile_context>
chip_gen: v5e
topology: v5e:2x2
jax: 0.10.0
libtpu: 0.0.40
codegen_flags: <defaults>
</compile_context>

<pallas_src>
import functools

import jax
import jax.numpy as jnp
import numpy as np
from jax import lax
from jax.experimental import pallas as pl
from jax.experimental.pallas import tpu as pltpu


def _round_up(x, m):
    return (x + m - 1) // m * m


def _cdiv(a, b):
    return (a + b - 1) // b


def _vmem_capacity_bytes():
    """Best-effort physical VMEM capacity; falls back to the v7x 64 MiB floor."""
    try:
        info = pltpu.get_tpu_info()
        for name in ("vmem_capacity_bytes", "vmem_size_bytes", "vmem_bytes"):
            v = getattr(info, name, None)
            if v is not None:
                v = int(v)
                if v > 0:
                    return v
    except Exception:
        pass
    return 64 * 1024 * 1024


def _vmem_limit_bytes(footprint, cap):
    return int(min(max(32 * 1024 * 1024, 2 * footprint + (4 << 20)),
                   100 * 1024 * 1024,
                   int(cap * 0.8)))


def _choose_depth_tile(dout, per_td_bytes, fixed_bytes, m_per_depth, n_batch,
                       budget_bytes, m_cap=4096):
    """Largest depth tile whose double-buffered footprint fits the VMEM budget
    while keeping M = td * m_per_depth in a lane/sublane-friendly range."""
    td = 1
    for t in range(1, dout + 1):
        if fixed_bytes + t * per_td_bytes > budget_bytes:
            break
        if t * m_per_depth > m_cap and t > 1:
            break
        td = t
    # Only force a depth split when the batch axis alone gives < 2 grid points.
    if n_batch * _cdiv(dout, td) < 2 and dout >= 2:
        td = min(td, _cdiv(dout, 2))
    return td


# ---------------------------------------------------------------------------
# Kernels
# ---------------------------------------------------------------------------
def _conv3d_im2col_kernel(xp_ref, w_ref, b_ref, o_ref, *, apply_relu):
    """Full-im2col path: one deep-K MXU matmul per grid step, fused epilogue.

    xp_ref : (1, TD, M_hw, Kp)      bf16   (Kp = KD*KH*KW*Cin padded to 128)
    w_ref  : (Kp, Coutp)            bf16
    b_ref  : (1, Coutp)             f32
    o_ref  : (1, TD, M_hw, Coutp)   f32
    """
    _, td, m_hw, kp = xp_ref.shape
    coutp = o_ref.shape[-1]
    x2d = xp_ref[0].reshape(td * m_hw, kp)        # contiguous leading-dim merge
    acc = jnp.dot(x2d, w_ref[...], preferred_element_type=jnp.float32)
    out = acc + b_ref[0].astype(jnp.float32)
    if apply_relu:
        out = jnp.maximum(out, 0.0)
    o_ref[0] = out.reshape(td, m_hw, coutp).astype(o_ref.dtype)


def _conv3d_khloop_kernel(xp_ref, w_ref, b_ref, o_ref, *, kh_taps, apply_relu):
    """Fallback (large packed K): kd/kw packed into channels, KH looped in-kernel
    with a loop-carried f32 accumulator (no explicit VMEM acc round-trips) and a
    fused bias/activation epilogue.

    xp_ref : (1, TD, Hsp, Wout, Kp)      bf16
    w_ref  : (KH, Kp, Coutp)             bf16
    b_ref  : (1, Coutp)                  f32
    o_ref  : (1, TD, Hout, Wout, Coutp)  f32
    """
    _, td, hout, wout, coutp = o_ref.shape
    xb = xp_ref[0]                                 # (TD, Hsp, Wout, Kp)
    kp = xb.shape[-1]
    m = td * hout * wout
    acc = None
    for ikh in range(kh_taps):
        # Shift only along H (leading, non-tiled axis).
        # TODO(synk): this slice + reshape is non-contiguous across depth slices
        # and costs a VMEM copy per tap; a manual-DMA tap gather would remove it.
        p2d = xb[:, ikh:ikh + hout, :, :].reshape(m, kp)
        c = jnp.dot(p2d, w_ref[ikh], preferred_element_type=jnp.float32)
        acc = c if acc is None else acc + c
    out = acc + b_ref[0].astype(jnp.float32)
    if apply_relu:
        out = jnp.maximum(out, 0.0)
    o_ref[0] = out.reshape(td, hout, wout, coutp).astype(o_ref.dtype)


# ---------------------------------------------------------------------------
# Wrapper: layout glue (transpose / pad / tap-pack) + pallas_call.
# ---------------------------------------------------------------------------
_FULL_PACK_MAX_K = 256   # full im2col when packed K (rounded to 128) stays <= this


def conv3d(x, weight, bias=None, *, stride=1, padding=0, dilation=1,
           activation=None, out_dtype=jnp.float32):
    """Forward pass of the PyTorch Conv3d module (conv + optional activation).

    x      : (N, Cin, D, H, W)       (NCDHW, PyTorch layout)
    weight : (Cout, Cin, KD, KH, KW)
    bias   : (Cout,) or None
    activation : None, "relu" (fused in-kernel), or a callable (applied in JAX).
    """
    def _triple(v):
        return (v, v, v) if isinstance(v, int) else tuple(v)

    stride, padding, dilation = _triple(stride), _triple(padding), _triple(dilation)
    # TODO(synk): only stride=1 / dilation=1 are implemented in the Pallas path.
    assert stride == (1, 1, 1) and dilation == (1, 1, 1)

    n, cin, d, h, w = x.shape
    cout, cin_w, kd, kh, kw = weight.shape
    assert cin_w == cin
    pd, ph, pw = padding

    dout = d + 2 * pd - kd + 1
    hout = h + 2 * ph - kh + 1
    wout = w + 2 * pw - kw + 1
    hsp = h + 2 * ph
    assert dout >= 1 and hout >= 1 and wout >= 1

    apply_relu = (activation == "relu")
    coutp = _round_up(cout, 128)
    # TODO(synk): on v6e/v7x (2x256x256 MXU) rounding K / Cout to 256 when the
    # real sizes permit would roughly double MXU utilisation when compute-bound.

    b = jnp.zeros((cout,), jnp.float32) if bias is None else bias.astype(jnp.float32)
    bp = jnp.pad(b, (0, coutp - cout)).reshape(1, coutp)

    # ---- wrapper-side layout glue (pure JAX) --------------------------------
    # TODO(synk): accepting NDHWC inputs / emitting NDHWC (or bf16) outputs
    # directly would remove two full HBM transpose passes for channels-last use.
    x_ndhwc = jnp.transpose(x, (0, 2, 3, 4, 1)).astype(jnp.bfloat16)
    xsp = jnp.pad(x_ndhwc, ((0, 0), (pd, pd), (ph, ph), (pw, pw), (0, 0)))

    vmem_cap = _vmem_capacity_bytes()
    budget = int(vmem_cap * 0.5)

    kpack_full = kd * kh * kw * cin
    use_full_pack = _round_up(kpack_full, 128) <= _FULL_PACK_MAX_K

    if use_full_pack:
        # ---- full im2col over (kd, kh, kw): single deep-K matmul per step ----
        kp = _round_up(kpack_full, 128)
        m_hw = hout * wout
        parts = []
        for ikd in range(kd):
            for ikh in range(kh):
                for ikw in range(kw):
                    parts.append(
                        xsp[:, ikd:ikd + dout, ikh:ikh + hout, ikw:ikw + wout, :])
        xpk = jnp.concatenate(parts, axis=-1)        # (N, Dout, Hout, Wout, Kfull)
        xpk = xpk.reshape(n, dout, m_hw, kpack_full)  # flatten H*W -> sublane-dense

        # weight: (Cout,Cin,KD,KH,KW) -> (KD,KH,KW,Cin,Cout) -> (Kp, Coutp)
        wp = jnp.transpose(weight, (2, 3, 4, 1, 0)).reshape(kpack_full, cout)
        wp = jnp.pad(wp, ((0, kp - kpack_full), (0, coutp - cout))).astype(jnp.bfloat16)

        per_td = 2 * (m_hw * kp * 2) + 2 * (m_hw * coutp * 4)
        fixed = 2 * (kp * coutp * 2) + coutp * 4
        td = _choose_depth_tile(dout, per_td, fixed, m_hw, n, budget)
        doutp = _round_up(dout, td)                  # pad Dout (handles prime Dout)
        xpk = jnp.pad(xpk, ((0, 0), (0, doutp - dout), (0, 0), (0, kp - kpack_full)))

        footprint = fixed + td * per_td
        vmem_limit = _vmem_limit_bytes(footprint, vmem_cap)

        grid = (n, doutp // td)
        kernel = functools.partial(_conv3d_im2col_kernel, apply_relu=apply_relu)
        out = pl.pallas_call(
            kernel,
            out_shape=jax.ShapeDtypeStruct((n, doutp, m_hw, coutp), out_dtype),
            grid_spec=pltpu.PrefetchScalarGridSpec(
                num_scalar_prefetch=0,
                grid=grid,
                in_specs=[
                    pl.BlockSpec((1, td, m_hw, kp), lambda ni, di: (ni, di, 0, 0)),
                    pl.BlockSpec((kp, coutp), lambda ni, di: (0, 0)),
                    pl.BlockSpec((1, coutp), lambda ni, di: (0, 0)),
                ],
                out_specs=pl.BlockSpec((1, td, m_hw, coutp),
                                       lambda ni, di: (ni, di, 0, 0)),
            ),
            compiler_params=pltpu.CompilerParams(
                dimension_semantics=("parallel", "parallel"),
                vmem_limit_bytes=vmem_limit,
            ),
        )(xpk, wp, bp)
        out = out[:, :dout, :, :cout].reshape(n, dout, hout, wout, cout)
    else:
        # ---- fallback: pack (kd, kw) into channels, loop KH in-kernel --------
        # TODO(synk): for Cin >= 128 a manual-DMA tap gather from a pl.ANY HBM
        # ref would avoid the KD*KW activation blow-up materialised here.
        kpw = kd * kw * cin
        kp = _round_up(kpw, 128)
        parts = []
        for ikd in range(kd):
            for ikw in range(kw):
                parts.append(xsp[:, ikd:ikd + dout, :, ikw:ikw + wout, :])
        xpk = jnp.concatenate(parts, axis=-1)        # (N, Dout, Hsp, Wout, KD*KW*Cin)

        # weight: (Cout,Cin,KD,KH,KW) -> (KH,KD,KW,Cin,Cout) -> (KH, Kp, Coutp)
        wp = jnp.transpose(weight, (3, 2, 4, 1, 0)).reshape(kh, kpw, cout)
        wp = jnp.pad(wp, ((0, 0), (0, kp - kpw), (0, coutp - cout))).astype(jnp.bfloat16)

        per_td = (2 * (hsp * wout * kp * 2) + 2 * (hout * wout * coutp * 4)
                  + hout * wout * coutp * 4 + hout * wout * kp * 2)
        fixed = 2 * (kh * kp * coutp * 2) + coutp * 4
        td = _choose_depth_tile(dout, per_td, fixed, hout * wout, n, budget)
        doutp = _round_up(dout, td)
        xpk = jnp.pad(xpk, ((0, 0), (0, doutp - dout), (0, 0), (0, 0), (0, kp - kpw)))

        footprint = fixed + td * per_td
        vmem_limit = _vmem_limit_bytes(footprint, vmem_cap)

        grid = (n, doutp // td)
        kernel = functools.partial(_conv3d_khloop_kernel, kh_taps=kh,
                                   apply_relu=apply_relu)
        out = pl.pallas_call(
            kernel,
            out_shape=jax.ShapeDtypeStruct((n, doutp, hout, wout, coutp), out_dtype),
            grid_spec=pltpu.PrefetchScalarGridSpec(
                num_scalar_prefetch=0,
                grid=grid,
                in_specs=[
                    pl.BlockSpec((1, td, hsp, wout, kp),
                                 lambda ni, di: (ni, di, 0, 0, 0)),
                    pl.BlockSpec((kh, kp, coutp), lambda ni, di: (0, 0, 0)),
                    pl.BlockSpec((1, coutp), lambda ni, di: (0, 0)),
                ],
                out_specs=pl.BlockSpec((1, td, hout, wout, coutp),
                                       lambda ni, di: (ni, di, 0, 0, 0)),
            ),
            compiler_params=pltpu.CompilerParams(
                dimension_semantics=("parallel", "parallel"),
                vmem_limit_bytes=vmem_limit,
            ),
        )(xpk, wp, bp)
        out = out[:, :dout, :, :, :cout]             # (N, Dout, Hout, Wout, Cout)

    out = jnp.transpose(out, (0, 4, 1, 2, 3))        # back to NCDHW
    if activation is not None and not apply_relu:
        out = activation(out)                        # non-ReLU activations: plain JAX
    return out


# ---------------------------------------------------------------------------
# Pure-JAX reference (mirrors the PyTorch forward) for verification.
# Uses the same bf16-rounded operands as the kernel's MXU path, f32 accumulate.
# ---------------------------------------------------------------------------
def conv3d_ref(x, weight, bias, stride, padding, dilation, relu):
    xh = x.astype(jnp.bfloat16).astype(jnp.float32)
    wh = weight.astype(jnp.bfloat16).astype(jnp.float32)
    x_nd = jnp.transpose(xh, (0, 2, 3, 4, 1))
    w_io = jnp.transpose(wh, (2, 3, 4, 1, 0))        # DHWIO
    y = lax.conv_general_dilated(
        x_nd, w_io, window_strides=stride,
        padding=[(p, p) for p in padding], rhs_dilation=dilation,
        dimension_numbers=("NDHWC", "DHWIO", "NDHWC"),
        precision=lax.Precision.HIGHEST)
    if bias is not None:
        y = y + bias
    if relu:
        y = jnp.maximum(y, 0.0)
    return jnp.transpose(y, (0, 4, 1, 2, 3))


if __name__ == "__main__":
    key = jax.random.PRNGKey(0)
    kx, kwt, kb, kx2, kw2 = jax.random.split(key, 5)

    # --- case 1: small Cin -> full-im2col single-matmul path -----------------
    N, Cin, Cout, D, H, W, KS = 2, 4, 8, 8, 8, 8, 3
    x = jax.random.normal(kx, (N, Cin, D, H, W), jnp.float32)
    fan_in = Cin * KS * KS * KS
    weight = jax.random.normal(kwt, (Cout, Cin, KS, KS, KS), jnp.float32) / np.sqrt(fan_in)
    bias = jax.random.normal(kb, (Cout,), jnp.float32) * 0.1

    out_relu = jax.block_until_ready(
        conv3d(x, weight, bias, stride=1, padding=1, dilation=1, activation="relu"))
    out_lin = jax.block_until_ready(
        conv3d(x, weight, bias, stride=1, padding=1, dilation=1, activation=None))

    ref_relu = conv3d_ref(x, weight, bias, (1, 1, 1), (1, 1, 1), (1, 1, 1), relu=True)
    ref_lin = conv3d_ref(x, weight, bias, (1, 1, 1), (1, 1, 1), (1, 1, 1), relu=False)
    np.testing.assert_allclose(np.asarray(out_relu), np.asarray(ref_relu),
                               rtol=2e-3, atol=2e-3)
    np.testing.assert_allclose(np.asarray(out_lin), np.asarray(ref_lin),
                               rtol=2e-3, atol=2e-3)

    # --- case 2: larger Cin -> kd/kw-packed fallback path (KH looped) --------
    N2, Cin2, Cout2, D2, KS2 = 1, 32, 16, 6, 3
    x2 = jax.random.normal(kx2, (N2, Cin2, D2, D2, D2), jnp.float32)
    w2 = jax.random.normal(kw2, (Cout2, Cin2, KS2, KS2, KS2),
                           jnp.float32) / np.sqrt(Cin2 * KS2 ** 3)

    out2 = jax.block_until_ready(
        conv3d(x2, w2, None, stride=1, padding=1, dilation=1, activation="relu"))
    ref2 = conv3d_ref(x2, w2, None, (1, 1, 1), (1, 1, 1), (1, 1, 1), relu=True)
    np.testing.assert_allclose(np.asarray(out2), np.asarray(ref2),
                               rtol=2e-3, atol=2e-3)

    print("KERNEL_OK")
</pallas_src>

<mosaic_0001>
module attributes {stable_mosaic.version = 11 : i64} {
  func.func @_conv3d_im2col_kernel(%arg0: i32, %arg1: i32, %arg2: memref<1x8x64x128xbf16, #tpu.memory_space<vmem>>, %arg3: memref<128x128xbf16, #tpu.memory_space<vmem>>, %arg4: memref<1x128xf32, #tpu.memory_space<vmem>>, %arg5: memref<1x8x64x128xf32, #tpu.memory_space<vmem>>) attributes {dimension_semantics = [#tpu.dimension_semantics<parallel>, #tpu.dimension_semantics<parallel>], iteration_bounds = array<i64: 2, 1>, scalar_prefetch = 0 : i64, scratch_operands = 0 : i64, tpu.core_type = #tpu.core_type<tc>, window_params = [{transform_indices = @transform_0, window_bounds = array<i64: 1, 8, 64, 128>}, {pipeline_mode = #tpu.pipeline_mode<synchronous>, transform_indices = @transform_1, window_bounds = array<i64: 128, 128>}, {pipeline_mode = #tpu.pipeline_mode<synchronous>, transform_indices = @transform_2, window_bounds = array<i64: 1, 128>}, {transform_indices = @transform_3, window_bounds = array<i64: 1, 8, 64, 128>}]} {
    %c0 = arith.constant 0 : index
    %c0_0 = arith.constant 0 : index
    %c0_1 = arith.constant 0 : index
    %c0_2 = arith.constant 0 : index
    %0 = vector.load %arg2[%c0, %c0_0, %c0_1, %c0_2] : memref<1x8x64x128xbf16, #tpu.memory_space<vmem>>, vector<1x8x64x128xbf16>
    %1 = vector.shape_cast %0 : vector<1x8x64x128xbf16> to vector<8x64x128xbf16>
    %2 = vector.shape_cast %1 : vector<8x64x128xbf16> to vector<512x128xbf16>
    %c0_3 = arith.constant 0 : index
    %c0_4 = arith.constant 0 : index
    %3 = vector.load %arg3[%c0_3, %c0_4] : memref<128x128xbf16, #tpu.memory_space<vmem>>, vector<128x128xbf16>
    %cst = arith.constant dense<0.000000e+00> : vector<512x128xf32>
    %4 = tpu.matmul %2, %3, %cst {dimension_numbers = #tpu.dot_dimension_numbers<[1], [0], [0], [1], [0, 0, 1, 1], [], []>} : vector<512x128xbf16>, vector<128x128xbf16>, vector<512x128xf32> -> vector<512x128xf32>
    %c0_5 = arith.constant 0 : index
    %c0_6 = arith.constant 0 : index
    %5 = vector.load %arg4[%c0_5, %c0_6] : memref<1x128xf32, #tpu.memory_space<vmem>>, vector<1x128xf32>
    %6 = vector.shape_cast %5 : vector<1x128xf32> to vector<128xf32>
    %7 = vector.shape_cast %6 : vector<128xf32> to vector<1x128xf32>
    %8 = vector.broadcast %7 : vector<1x128xf32> to vector<512x128xf32>
    %9 = arith.addf %4, %8 : vector<512x128xf32>
    %cst_7 = arith.constant 0.000000e+00 : f32
    %10 = vector.broadcast %cst_7 : f32 to vector<512x128xf32>
    %11 = arith.maximumf %9, %10 : vector<512x128xf32>
    %12 = vector.shape_cast %11 : vector<512x128xf32> to vector<8x64x128xf32>
    %c0_8 = arith.constant 0 : index
    %c0_9 = arith.constant 0 : index
    %c0_10 = arith.constant 0 : index
    %c0_11 = arith.constant 0 : index
    %13 = vector.load %arg5[%c0_8, %c0_9, %c0_10, %c0_11] : memref<1x8x64x128xf32, #tpu.memory_space<vmem>>, vector<1x8x64x128xf32>
    %14 = vector.shape_cast %13 : vector<1x8x64x128xf32> to vector<8x64x128xf32>
    %15 = vector.shape_cast %12 : vector<8x64x128xf32> to vector<1x8x64x128xf32>
    tpu.vector_store %arg5[%c0_8, %c0_9, %c0_10, %c0_11], %15 {strides = array<i32>} : memref<1x8x64x128xf32, #tpu.memory_space<vmem>>, vector<1x8x64x128xf32>,
    return
  }
  func.func @transform_0(%arg0: i32, %arg1: i32) -> (i32, i32, i32, i32) {
    %c0_i32 = arith.constant 0 : i32
    %c0_i32_0 = arith.constant 0 : i32
    %c0_i32_1 = arith.constant 0 : i32
    return %arg0, %arg1, %c0_i32, %c0_i32_0 : i32, i32, i32, i32
  }
  func.func @transform_1(%arg0: i32, %arg1: i32) -> (i32, i32) {
    %c0_i32 = arith.constant 0 : i32
    %c0_i32_0 = arith.constant 0 : i32
    %c0_i32_1 = arith.constant 0 : i32
    return %c0_i32, %c0_i32_0 : i32, i32
  }
  func.func @transform_2(%arg0: i32, %arg1: i32) -> (i32, i32) {
    %c0_i32 = arith.constant 0 : i32
    %c0_i32_0 = arith.constant 0 : i32
    %c0_i32_1 = arith.constant 0 : i32
    return %c0_i32, %c0_i32_0 : i32, i32
  }
  func.func @transform_3(%arg0: i32, %arg1: i32) -> (i32, i32, i32, i32) {
    %c0_i32 = arith.constant 0 : i32
    %c0_i32_0 = arith.constant 0 : i32
    %c0_i32_1 = arith.constant 0 : i32
    return %arg0, %arg1, %c0_i32, %c0_i32_0 : i32, i32, i32, i32
  }
}

</mosaic_0001>

<llo_original>
// kernel: tpu_custom_call.1
$region0: #{tpu_custom_call.1}
  #allocation0 [shape = 'u32[]', space=smem, size = 0x4, offset = 0x4, fixed_abs, tag = 'smem constant byte address 0x4 - core index']
  #allocation1 [shape = 'u32[72,128]{1,0:T(1,128)}', space=vmem, size = 0x9000, scoped, tag = 'internal scratch']
  %s0 = inlined_call_operand.hbm [shape: bf16[2,8,64,128], index: 0, kind: input, shape index: {}]
  %s1 = inlined_call_operand.hbm [shape: bf16[128,128], index: 1, kind: input, shape index: {}]
  %s2 = inlined_call_operand.vmem [shape: f32[1,128], index: 2, kind: input, shape index: {}]
  %s3 = inlined_call_operand.hbm [shape: f32[2,8,64,128], index: 3, kind: output, shape index: {}]
  %s4 = sld [smem:[#allocation0]]
  $region53: #{tpu_custom_call.1} parent=0
    _
  %s6 = ssub.s32 1, %s4
  %s7 = scalar_select 0, %s6, %s4
  $region1: #{tpu_custom_call.1} parent=0
    #allocation2 [shape = 'u8[262144]{0}', space=vmem, size = 0x40000, scoped, tag = 'input window, operand 0']
    #allocation3 [shape = 's32[2]{0}', space=sflag, size = 0x8, scoped, tag = 'scoped memory for tpu_custom_call.1']
    #allocation4 [shape = 's32[2]{0}', space=sflag, size = 0x8, scoped, tag = 'scoped memory for tpu_custom_call.1']
    #allocation5 [shape = 'u8[32768]{0}', space=vmem, size = 0x8000, scoped, tag = 'input window, operand 1, single buffered']
    #allocation6 [shape = 's32[1]{0}', space=sflag, size = 0x4, scoped, tag = 'scoped memory for tpu_custom_call.1']
    #allocation7 [shape = 'u8[524288]{0}', space=vmem, size = 0x80000, scoped, tag = 'output window, operand 0']
    %8 = vsyncpa [#allocation3], 0
    %s9 = scalar_lea.sflag [#allocation3], 1
    %10 = vsyncpa %s9, 0
    %11 = vsyncpa [#allocation6], 0
    %12 = vsyncpa [#allocation4], 0
    %s13 = scalar_lea.sflag [#allocation4], 1
    %14 = vsyncpa %s13, 0
    loop: start=0, step=1, limit=4
    $region2: #{tpu_custom_call.1} parent=1 // loop_pre_header
      _
    $region3: #{tpu_custom_call.1} parent=1 // loop_header
      %s16 = sphi 0, %s20
      %p17 = scmp.ge.s32.totalorder %s16, 4
      %s23 = sphi 0, %s35
      %s24 = sphi 0, %s31
      %s25 = sphi 0, %s23
      %s26 = sphi 0, %s24
      %s27 = sphi 0, %s25
      %s28 = sphi 0, %s26
      %s40 = sphi 0, %s42
      %s43 = sphi 0, %s40
      %s44 = sphi 0, %s43
      %s60 = sphi 0, %s44
      %s64 = sphi 0, %s64
      %s66 = sphi 0, %s64
      %s67 = sphi 0, %s66
      %s81 = sphi 0, %s67
      %s85 = sphi 0, %s85
      %s87 = sphi 0, %s85
      %s88 = sphi 0, %s87
      %s102 = sphi 0, %s88
      %s110 = sphi 0, %s112
      %s113 = sphi 0, %s110
      %s114 = sphi 0, %s113
      %s130 = sphi 0, %s114
    $region4: #{tpu_custom_call.1} parent=1 // loop_header_branch
      %19 = sbr.rel (%p17) target = $region8
    $region5: #{tpu_custom_call.1} parent=1 // loop_body
      %s21 = ssub.s32 %s16, 1
      %s22 = ssub.s32 %s16, 2
      %s29 = sadd.s32 1, %s24
      %p30 = scmp.ge.s32.totalorder %s29, 1
      %s31 = scalar_select %p30, 0, %s29
      %s32 = sadd.s32 1, %s23
      %s33 = scalar_select %p30, %s32, %s23
      %p34 = scmp.ge.s32.totalorder %s33, 2
      %s35 = scalar_select %p34, 0, %s33
      %s36 = ssub.s32 %s23, %s35
      %s37 = ssub.s32 %s24, %s31
      %s38 = sor.u32 %s36, %s37
      %p39 = scmp.eq.s32.totalorder %s38, 0
      %s41 = sadd.s32 %s40, 1
      %s42 = scalar_select %p39, %s40, %s41
      %p45 = pneg %p39
      %p46 = scmp.eq.s32.totalorder %s16, 1
      %p47 = por %p45, %p46
      %p48 = scmp.ne.s32.totalorder %s40, %s43
      %p49 = scmp.eq.s32.totalorder %s16, 0
      %p50 = por %p48, %p49
      %p51 = scmp.ne.s32.totalorder %s40, %s43
      %p52 = scmp.eq.s32.totalorder %s21, 1
      %p53 = por %p51, %p52
      %p54 = scmp.ne.s32.totalorder %s43, %s44
      %p55 = scmp.eq.s32.totalorder %s21, 0
      %p56 = por %p54, %p55
      %p57 = scmp.ne.s32.totalorder %s43, %s44
      %p58 = scmp.eq.s32.totalorder %s22, 1
      %p59 = por %p57, %p58
      %p61 = scmp.ne.s32.totalorder %s44, %s60
      %p62 = scmp.eq.s32.totalorder %s22, 0
      %p63 = por %p61, %p62
      %s65 = sadd.s32 %s64, 1
      %p68 = scmp.eq.s32.totalorder %s16, 1
      %p69 = scmp.ne.s32.totalorder %s64, %s66
      %p70 = scmp.eq.s32.totalorder %s16, 0
      %p71 = por %p69, %p70
      %p72 = scmp.ne.s32.totalorder %s64, %s66
      %p73 = scmp.eq.s32.totalorder %s21, 1
      %p74 = por %p72, %p73
      %p75 = scmp.ne.s32.totalorder %s66, %s67
      %p76 = scmp.eq.s32.totalorder %s21, 0
      %p77 = por %p75, %p76
      %p78 = scmp.ne.s32.totalorder %s66, %s67
      %p79 = scmp.eq.s32.totalorder %s22, 1
      %p80 = por %p78, %p79
      %p82 = scmp.ne.s32.totalorder %s67, %s81
      %p83 = scmp.eq.s32.totalorder %s22, 0
      %p84 = por %p82, %p83
      %s86 = sadd.s32 %s85, 1
      %p89 = scmp.eq.s32.totalorder %s16, 1
      %p90 = scmp.ne.s32.totalorder %s85, %s87
      %p91 = scmp.eq.s32.totalorder %s16, 0
      %p92 = por %p90, %p91
      %p93 = scmp.ne.s32.totalorder %s85, %s87
      %p94 = scmp.eq.s32.totalorder %s21, 1
      %p95 = por %p93, %p94
      %p96 = scmp.ne.s32.totalorder %s87, %s88
      %p97 = scmp.eq.s32.totalorder %s21, 0
      %p98 = por %p96, %p97
      %p99 = scmp.ne.s32.totalorder %s87, %s88
      %p100 = scmp.eq.s32.totalorder %s22, 1
      %p101 = por %p99, %p100
      %p103 = scmp.ne.s32.totalorder %s88, %s102
      %p104 = scmp.eq.s32.totalorder %s22, 0
      %p105 = por %p103, %p104
      %s106 = ssub.s32 %s23, %s35
      %s107 = ssub.s32 %s24, %s31
      %s108 = sor.u32 %s106, %s107
      %p109 = scmp.eq.s32.totalorder %s108, 0
      %s111 = sadd.s32 %s110, 1
      %s112 = scalar_select %p109, %s110, %s111
      %p115 = pneg %p109
      %p116 = scmp.eq.s32.totalorder %s16, 1
      %p117 = por %p115, %p116
      %p118 = scmp.ne.s32.totalorder %s110, %s113
      %p119 = scmp.eq.s32.totalorder %s16, 0
      %p120 = por %p118, %p119
      %p121 = scmp.ne.s32.totalorder %s110, %s113
      %p122 = scmp.eq.s32.totalorder %s21, 1
      %p123 = por %p121, %p122
      %p124 = scmp.ne.s32.totalorder %s113, %s114
      %p125 = scmp.eq.s32.totalorder %s21, 0
      %p126 = por %p124, %p125
      %p127 = scmp.ne.s32.totalorder %s113, %s114
      %p128 = scmp.eq.s32.totalorder %s22, 1
      %p129 = por %p127, %p128
      %p131 = scmp.ne.s32.totalorder %s114, %s130
      %p132 = scmp.eq.s32.totalorder %s22, 0
      %p133 = por %p131, %p132
      %p134 = scmp.le.s32.totalorder 1, %s16
      %p135 = scmp.lt.s32.totalorder %s16, 3
      %p136 = pnand %p134, %p135
      %p137 = pneg %p136
      // Predicated region
      $region9: #{tpu_custom_call.1} parent=5 // pred_check
        _
      $region10: #{tpu_custom_call.1} parent=5 // pred_check_branch
        %139 = sbr.rel (%p136) target = $region12
      $region11: #{tpu_custom_call.1} parent=5 // pred_region
        %s140 = ssub.s32 %s16, 1
        // Predicated region
        $region13: #{tpu_custom_call.1} parent=11 // pred_check
          %p141 = pneg %p77
        $region14: #{tpu_custom_call.1} parent=11 // pred_check_branch
          %143 = sbr.rel (%p141) target = $region16
        $region15: #{tpu_custom_call.1} parent=11 // pred_region
          %145 = vsyncadd [#allocation6], 0
          %s146 = sshll.u32 %s1, 4
          %s147 = int_to_ptr.hbm [resolvable:$true] %s146
          %s148 = sshll.u32 [#allocation5], 4
          %s149 = int_to_ptr.vmem [resolvable:$true] %s148
          %154 = dma.hbm_to_vmem [thread:$0]  %s147, 1024, %s149, [#allocation6], 64, 64, 4
        $region16: #{tpu_custom_call.1} parent=11 // pred_fallthru
          _
        // Predicated region
        $region17: #{tpu_custom_call.1} parent=11 // pred_check
          %p155 = pneg %p98
        $region18: #{tpu_custom_call.1} parent=11 // pred_check_branch
          %157 = sbr.rel (%p155) target = $region20
        $region19: #{tpu_custom_call.1} parent=11 // pred_region
          _
        $region20: #{tpu_custom_call.1} parent=11 // pred_fallthru
          _
      $region12: #{tpu_custom_call.1} parent=5 // pred_fallthru
        _
      %p158 = scmp.lt.s32.totalorder %s16, 2
      // Predicated region
      $region21: #{tpu_custom_call.1} parent=5 // pred_check
        %p159 = pneg %p158
      $region22: #{tpu_custom_call.1} parent=5 // pred_check_branch
        %161 = sbr.rel (%p159) target = $region24
      $region23: #{tpu_custom_call.1} parent=5 // pred_region
        // Predicated region
        $region25: #{tpu_custom_call.1} parent=23 // pred_check
          %p162 = pneg %p50
        $region26: #{tpu_custom_call.1} parent=23 // pred_check_branch
          %164 = sbr.rel (%p162) target = $region28
        $region27: #{tpu_custom_call.1} parent=23 // pred_region
          %s165 = sand.u32 %s40, 1
          %s166 = scalar_lea.sflag [#allocation3], %s165
          %s167 = sand.u32 %s40, 1
          %s168 = smul.addr %s167, 256
          %s169 = scalar_lea.vmem [#allocation2], %s168
          %s170 = smul.u32 8, %s24
          %172 = vsyncadd %s166, 0
          %s173 = smul.addr %s170, 8
          %s174 = smul.addr %s23, 64
          %s175 = sadd.s32 %s173, %s174
          %s176 = smul.addr %s175, 4
          %s177 = scalar_lea.hbm %s0, %s176
          %s178 = sshll.u32 %s177, 4
          %s179 = int_to_ptr.hbm [resolvable:$true] %s178
          %s180 = sshll.u32 %s169, 4
          %s181 = int_to_ptr.vmem [resolvable:$true] %s180
          %186 = dma.hbm_to_vmem [thread:$0]  %s179, 4096, %s181, %s166, 64, 64, 4
        $region28: #{tpu_custom_call.1} parent=23 // pred_fallthru
          _
      $region24: #{tpu_custom_call.1} parent=5 // pred_fallthru
        _
      %p187 = scmp.le.s32.totalorder 1, %s16
      %p188 = scmp.lt.s32.totalorder %s16, 3
      %p189 = pnand %p187, %p188
      %p190 = pneg %p189
      // Predicated region
      $region29: #{tpu_custom_call.1} parent=5 // pred_check
        _
      $region30: #{tpu_custom_call.1} parent=5 // pred_check_branch
        %192 = sbr.rel (%p189) target = $region32
      $region31: #{tpu_custom_call.1} parent=5 // pred_region
        %s193 = ssub.s32 %s16, 1
        %s194 = sand.u32 %s43, 1
        %s195 = scalar_lea.sflag [#allocation3], %s194
        %s196 = sand.u32 %s43, 1
        %s197 = smul.addr %s196, 256
        %s198 = scalar_lea.vmem [#allocation2], %s197
        // Predicated region
        $region33: #{tpu_custom_call.1} parent=31 // pred_check
          %p199 = pneg %p56
        $region34: #{tpu_custom_call.1} parent=31 // pred_check_branch
          %201 = sbr.rel (%p199) target = $region36
        $region35: #{tpu_custom_call.1} parent=31 // pred_region
          %203 = dma.done %s195, 4096
        $region36: #{tpu_custom_call.1} parent=31 // pred_fallthru
          _
        // Predicated region
        $region37: #{tpu_custom_call.1} parent=31 // pred_check
          %p204 = pneg %p77
        $region38: #{tpu_custom_call.1} parent=31 // pred_check_branch
          %206 = sbr.rel (%p204) target = $region40
        $region39: #{tpu_custom_call.1} parent=31 // pred_region
          %208 = dma.done [#allocation6], 1024
        $region40: #{tpu_custom_call.1} parent=31 // pred_fallthru
          _
        %s209 = sand.u32 %s43, 1
        %s210 = scalar_lea.sflag [#allocation3], %s209
        %s211 = sand.u32 %s43, 1
        %s212 = smul.addr %s211, 256
        %s213 = scalar_lea.vmem [#allocation2], %s212
        %p214 = pneg %p56
        %p215 = pneg %p53
        %p216 = pneg %p77
        %p217 = pneg %p74
        %p218 = pneg %p98
        %p219 = pneg %p95
        %p220 = pneg %p126
        %p221 = pneg %p123
        %s222 = sand.u32 %s113, 1
        %s223 = scalar_lea.sflag [#allocation4], %s222
        %s224 = sand.u32 %s113, 1
        %s225 = smul.addr %s224, 512
        %s226 = scalar_lea.vmem [#allocation7], %s225
        %s227 = smul.u32 8, %s26
        %s228 = smul.u32 8, %s26
        %v229 = vld [vmem:[%s198] sm:$0xf]
        %v230 = vld [vmem:[%s198 + $0x4] sm:$0xf]
        %v231 = vld [vmem:[%s198 + $0x8] sm:$0xf]
        %v232 = vld [vmem:[%s198 + $0xc] sm:$0xf]
        %v233 = vld [vmem:[%s198 + $0x10] sm:$0xf]
        %v234 = vld [vmem:[%s198 + $0x14] sm:$0xf]
        %v235 = vld [vmem:[%s198 + $0x18] sm:$0xf]
        %v236 = vld [vmem:[%s198 + $0x1c] sm:$0xf]
        %v237 = vld [vmem:[%s198 + $0x20] sm:$0xf]
        %v238 = vld [vmem:[%s198 + $0x24] sm:$0xf]
        %v239 = vld [vmem:[%s198 + $0x28] sm:$0xf]
        %v240 = vld [vmem:[%s198 + $0x2c] sm:$0xf]
        %v241 = vld [vmem:[%s198 + $0x30] sm:$0xf]
        %v242 = vld [vmem:[%s198 + $0x34] sm:$0xf]
        %v243 = vld [vmem:[%s198 + $0x38] sm:$0xf]
        %v244 = vld [vmem:[%s198 + $0x3c] sm:$0xf]
        %v245 = vld [vmem:[%s198 + $0x40] sm:$0xf]
        %v246 = vld [vmem:[%s198 + $0x44] sm:$0xf]
        %v247 = vld [vmem:[%s198 + $0x48] sm:$0xf]
        %v248 = vld [vmem:[%s198 + $0x4c] sm:$0xf]
        %v249 = vld [vmem:[%s198 + $0x50] sm:$0xf]
        %v250 = vld [vmem:[%s198 + $0x54] sm:$0xf]
        %v251 = vld [vmem:[%s198 + $0x58] sm:$0xf]
        %v252 = vld [vmem:[%s198 + $0x5c] sm:$0xf]
        %v253 = vld [vmem:[%s198 + $0x60] sm:$0xf]
        %v254 = vld [vmem:[%s198 + $0x64] sm:$0xf]
        %v255 = vld [vmem:[%s198 + $0x68] sm:$0xf]
        %v256 = vld [vmem:[%s198 + $0x6c] sm:$0xf]
        %v257 = vld [vmem:[%s198 + $0x70] sm:$0xf]
        %v258 = vld [vmem:[%s198 + $0x74] sm:$0xf]
        %v259 = vld [vmem:[%s198 + $0x78] sm:$0xf]
        %v260 = vld [vmem:[%s198 + $0x7c] sm:$0xf]
        %v261 = vld [vmem:[%s198 + $0x80] sm:$0xf]
        %v262 = vld [vmem:[%s198 + $0x84] sm:$0xf]
        %v263 = vld [vmem:[%s198 + $0x88] sm:$0xf]
        %v264 = vld [vmem:[%s198 + $0x8c] sm:$0xf]
        %v265 = vld [vmem:[%s198 + $0x90] sm:$0xf]
        %v266 = vld [vmem:[%s198 + $0x94] sm:$0xf]
        %v267 = vld [vmem:[%s198 + $0x98] sm:$0xf]
        %v268 = vld [vmem:[%s198 + $0x9c] sm:$0xf]
        %v269 = vld [vmem:[%s198 + $0xa0] sm:$0xf]
        %v270 = vld [vmem:[%s198 + $0xa4] sm:$0xf]
        %v271 = vld [vmem:[%s198 + $0xa8] sm:$0xf]
        %v272 = vld [vmem:[%s198 + $0xac] sm:$0xf]
        %v273 = vld [vmem:[%s198 + $0xb0] sm:$0xf]
        %v274 = vld [vmem:[%s198 + $0xb4] sm:$0xf]
        %v275 = vld [vmem:[%s198 + $0xb8] sm:$0xf]
        %v276 = vld [vmem:[%s198 + $0xbc] sm:$0xf]
        %v277 = vld [vmem:[%s198 + $0xc0] sm:$0xf]
        %v278 = vld [vmem:[%s198 + $0xc4] sm:$0xf]
        %v279 = vld [vmem:[%s198 + $0xc8] sm:$0xf]
        %v280 = vld [vmem:[%s198 + $0xcc] sm:$0xf]
        %v281 = vld [vmem:[%s198 + $0xd0] sm:$0xf]
        %v282 = vld [vmem:[%s198 + $0xd4] sm:$0xf]
        %v283 = vld [vmem:[%s198 + $0xd8] sm:$0xf]
        %v284 = vld [vmem:[%s198 + $0xdc] sm:$0xf]
        %v285 = vld [vmem:[%s198 + $0xe0] sm:$0xf]
        %v286 = vld [vmem:[%s198 + $0xe4] sm:$0xf]
        %v287 = vld [vmem:[%s198 + $0xe8] sm:$0xf]
        %v288 = vld [vmem:[%s198 + $0xec] sm:$0xf]
        %v289 = vld [vmem:[%s198 + $0xf0] sm:$0xf]
        %v290 = vld [vmem:[%s198 + $0xf4] sm:$0xf]
        %v291 = vld [vmem:[%s198 + $0xf8] sm:$0xf]
        %v292 = vld [vmem:[%s198 + $0xfc] sm:$0xf]
        %v293 = vld [vmem:[#allocation5] sm:$0xf]
        %v294 = vld [vmem:[#allocation5 + $0x4] sm:$0xf]
        %v295 = vld [vmem:[#allocation5 + $0x8] sm:$0xf]
        %v296 = vld [vmem:[#allocation5 + $0xc] sm:$0xf]
        %v297 = vld [vmem:[#allocation5 + $0x10] sm:$0xf]
        %v298 = vld [vmem:[#allocation5 + $0x14] sm:$0xf]
        %v299 = vld [vmem:[#allocation5 + $0x18] sm:$0xf]
        %v300 = vld [vmem:[#allocation5 + $0x1c] sm:$0xf]
        %v301 = vld [vmem:[#allocation5 + $0x20] sm:$0xf]
        %v302 = vld [vmem:[#allocation5 + $0x24] sm:$0xf]
        %v303 = vld [vmem:[#allocation5 + $0x28] sm:$0xf]
        %v304 = vld [vmem:[#allocation5 + $0x2c] sm:$0xf]
        %v305 = vld [vmem:[#allocation5 + $0x30] sm:$0xf]
        %v306 = vld [vmem:[#allocation5 + $0x34] sm:$0xf]
        %v307 = vld [vmem:[#allocation5 + $0x38] sm:$0xf]
        %v308 = vld [vmem:[#allocation5 + $0x3c] sm:$0xf]
        %v309 = vld [vmem:[%s2] sm:$0x1]
        %v311 = vperm.slane %v309, 0
        %v377 = vunpack.c.l.b16 %v229
        %v378 = vunpack.c.l.b16 %v230
        %v379 = vunpack.c.l.b16 %v231
        %v380 = vunpack.c.l.b16 %v232
        %v381 = vunpack.c.l.b16 %v233
        %v382 = vunpack.c.l.b16 %v234
        %v383 = vunpack.c.l.b16 %v235
        %v384 = vunpack.c.l.b16 %v236
        %v385 = vunpack.c.l.b16 %v237
        %v386 = vunpack.c.l.b16 %v238
        %v387 = vunpack.c.l.b16 %v239
        %v388 = vunpack.c.l.b16 %v240
        %v389 = vunpack.c.l.b16 %v241
        %v390 = vunpack.c.l.b16 %v242
        %v391 = vunpack.c.l.b16 %v243
        %v392 = vunpack.c.l.b16 %v244
        %v393 = vunpack.c.l.b16 %v245
        %v394 = vunpack.c.l.b16 %v246
        %v395 = vunpack.c.l.b16 %v247
        %v396 = vunpack.c.l.b16 %v248
        %v397 = vunpack.c.l.b16 %v249
        %v398 = vunpack.c.l.b16 %v250
        %v399 = vunpack.c.l.b16 %v251
        %v400 = vunpack.c.l.b16 %v252
        %v401 = vunpack.c.l.b16 %v253
        %v402 = vunpack.c.l.b16 %v254
        %v403 = vunpack.c.l.b16 %v255
        %v404 = vunpack.c.l.b16 %v256
        %v405 = vunpack.c.l.b16 %v257
        %v406 = vunpack.c.l.b16 %v258
        %v407 = vunpack.c.l.b16 %v259
        %v408 = vunpack.c.l.b16 %v260
        %v409 = vunpack.c.l.b16 %v261
        %v410 = vunpack.c.l.b16 %v262
        %v411 = vunpack.c.l.b16 %v263
        %v412 = vunpack.c.l.b16 %v264
        %v413 = vunpack.c.l.b16 %v265
        %v414 = vunpack.c.l.b16 %v266
        %v415 = vunpack.c.l.b16 %v267
        %v416 = vunpack.c.l.b16 %v268
        %v417 = vunpack.c.l.b16 %v269
        %v418 = vunpack.c.l.b16 %v270
        %v419 = vunpack.c.l.b16 %v271
        %v420 = vunpack.c.l.b16 %v272
        %v421 = vunpack.c.l.b16 %v273
        %v422 = vunpack.c.l.b16 %v274
        %v423 = vunpack.c.l.b16 %v275
        %v424 = vunpack.c.l.b16 %v276
        %v425 = vunpack.c.l.b16 %v277
        %v426 = vunpack.c.l.b16 %v278
        %v427 = vunpack.c.l.b16 %v279
        %v428 = vunpack.c.l.b16 %v280
        %v429 = vunpack.c.l.b16 %v281
        %v430 = vunpack.c.l.b16 %v282
        %v431 = vunpack.c.l.b16 %v283
        %v432 = vunpack.c.l.b16 %v284
        %v433 = vunpack.c.l.b16 %v285
        %v434 = vunpack.c.l.b16 %v286
        %v435 = vunpack.c.l.b16 %v287
        %v436 = vunpack.c.l.b16 %v288
        %v437 = vunpack.c.l.b16 %v289
        %v438 = vunpack.c.l.b16 %v290
        %v439 = vunpack.c.l.b16 %v291
        %v440 = vunpack.c.l.b16 %v292
        %v441 = vpack.c.b16 %v378, %v377
        %v442 = vpack.c.b16 %v380, %v379
        %v443 = vpack.c.b16 %v382, %v381
        %v444 = vpack.c.b16 %v384, %v383
        %v445 = vpack.c.b16 %v386, %v385
        %v446 = vpack.c.b16 %v388, %v387
        %v447 = vpack.c.b16 %v390, %v389
        %v448 = vpack.c.b16 %v392, %v391
        %v449 = vpack.c.b16 %v394, %v393
        %v450 = vpack.c.b16 %v396, %v395
        %v451 = vpack.c.b16 %v398, %v397
        %v452 = vpack.c.b16 %v400, %v399
        %v453 = vpack.c.b16 %v402, %v401
        %v454 = vpack.c.b16 %v404, %v403
        %v455 = vpack.c.b16 %v406, %v405
        %v456 = vpack.c.b16 %v408, %v407
        %v457 = vpack.c.b16 %v410, %v409
        %v458 = vpack.c.b16 %v412, %v411
        %v459 = vpack.c.b16 %v414, %v413
        %v460 = vpack.c.b16 %v416, %v415
        %v461 = vpack.c.b16 %v418, %v417
        %v462 = vpack.c.b16 %v420, %v419
        %v463 = vpack.c.b16 %v422, %v421
        %v464 = vpack.c.b16 %v424, %v423
        %v465 = vpack.c.b16 %v426, %v425
        %v466 = vpack.c.b16 %v428, %v427
        %v467 = vpack.c.b16 %v430, %v429
        %v468 = vpack.c.b16 %v432, %v431
        %v469 = vpack.c.b16 %v434, %v433
        %v470 = vpack.c.b16 %v436, %v435
        %v471 = vpack.c.b16 %v438, %v437
        %v472 = vpack.c.b16 %v440, %v439
        %v521 = vunpack.c.l.b16 %v293
        %v522 = vunpack.c.l.b16 %v294
        %v523 = vunpack.c.l.b16 %v295
        %v524 = vunpack.c.l.b16 %v296
        %v525 = vunpack.c.l.b16 %v297
        %v526 = vunpack.c.l.b16 %v298
        %v527 = vunpack.c.l.b16 %v299
        %v528 = vunpack.c.l.b16 %v300
        %v529 = vunpack.c.l.b16 %v301
        %v530 = vunpack.c.l.b16 %v302
        %v531 = vunpack.c.l.b16 %v303
        %v532 = vunpack.c.l.b16 %v304
        %v533 = vunpack.c.l.b16 %v305
        %v534 = vunpack.c.l.b16 %v306
        %v535 = vunpack.c.l.b16 %v307
        %v536 = vunpack.c.l.b16 %v308
        %v537 = vpack.c.b16 %v522, %v521
        %v538 = vpack.c.b16 %v524, %v523
        %v539 = vpack.c.b16 %v526, %v525
        %v540 = vpack.c.b16 %v528, %v527
        %v541 = vpack.c.b16 %v530, %v529
        %v542 = vpack.c.b16 %v532, %v531
        %v543 = vpack.c.b16 %v534, %v533
        %v544 = vpack.c.b16 %v536, %v535
        %553 = vmatpush.bf16.msra.mxu0 %v544
        %554 = vmatpush.bf16.msra.mxu0 %v543
        %555 = vmatpush.bf16.msra.mxu0 %v542
        %556 = vmatpush.bf16.msra.mxu0 %v541
        %557 = vmatpush.bf16.msra.mxu0 %v540
        %558 = vmatpush.bf16.msra.mxu0 %v539
        %559 = vmatpush.bf16.msra.mxu0 %v538
        %560 = vmatpush.bf16.msra.mxu0 %v537
        %561 = vmatmul.bf16.gmra.mxu0 %v441
        %v562 = vpop.f32.mrf.mxu0
        %v563 = vadd.f32 %v311, %v562
        %v564 = vpop.f32.mrf.mxu0
        %v565 = vadd.f32 %v311, %v564
        %566 = vmatmul.bf16.gmra.mxu0 %v442
        %v567 = vpop.f32.mrf.mxu0
        %v568 = vadd.f32 %v311, %v567
        %v569 = vpop.f32.mrf.mxu0
        %v570 = vadd.f32 %v311, %v569
        %571 = vmatmul.bf16.gmra.mxu0 %v443
        %v572 = vpop.f32.mrf.mxu0
        %v573 = vadd.f32 %v311, %v572
        %v574 = vpop.f32.mrf.mxu0
        %v575 = vadd.f32 %v311, %v574
        %576 = vmatmul.bf16.gmra.mxu0 %v444
        %v577 = vpop.f32.mrf.mxu0
        %v578 = vadd.f32 %v311, %v577
        %v579 = vpop.f32.mrf.mxu0
        %v580 = vadd.f32 %v311, %v579
        %581 = vmatmul.bf16.gmra.mxu0 %v445
        %v582 = vpop.f32.mrf.mxu0
        %v583 = vadd.f32 %v311, %v582
        %v584 = vpop.f32.mrf.mxu0
        %v585 = vadd.f32 %v311, %v584
        %586 = vmatmul.bf16.gmra.mxu0 %v446
        %v587 = vpop.f32.mrf.mxu0
        %v588 = vadd.f32 %v311, %v587
        %v589 = vpop.f32.mrf.mxu0
        %v590 = vadd.f32 %v311, %v589
        %591 = vmatmul.bf16.gmra.mxu0 %v447
        %v592 = vpop.f32.mrf.mxu0
        %v593 = vadd.f32 %v311, %v592
        %v594 = vpop.f32.mrf.mxu0
        %v595 = vadd.f32 %v311, %v594
        %596 = vmatmul.bf16.gmra.mxu0 %v448
        %v597 = vpop.f32.mrf.mxu0
        %v598 = vadd.f32 %v311, %v597
        %v599 = vpop.f32.mrf.mxu0
        %v600 = vadd.f32 %v311, %v599
        %601 = vmatmul.bf16.gmra.mxu0 %v449
        %v602 = vpop.f32.mrf.mxu0
        %v603 = vadd.f32 %v311, %v602
        %v604 = vpop.f32.mrf.mxu0
        %v605 = vadd.f32 %v311, %v604
        %606 = vmatmul.bf16.gmra.mxu0 %v450
        %v607 = vpop.f32.mrf.mxu0
        %v608 = vadd.f32 %v311, %v607
        %v609 = vpop.f32.mrf.mxu0
        %v610 = vadd.f32 %v311, %v609
        %611 = vmatmul.bf16.gmra.mxu0 %v451
        %v612 = vpop.f32.mrf.mxu0
        %v613 = vadd.f32 %v311, %v612
        %v614 = vpop.f32.mrf.mxu0
        %v615 = vadd.f32 %v311, %v614
        %616 = vmatmul.bf16.gmra.mxu0 %v452
        %v617 = vpop.f32.mrf.mxu0
        %v618 = vadd.f32 %v311, %v617
        %v619 = vpop.f32.mrf.mxu0
        %v620 = vadd.f32 %v311, %v619
        %621 = vmatmul.bf16.gmra.mxu0 %v453
        %v622 = vpop.f32.mrf.mxu0
        %v623 = vadd.f32 %v311, %v622
        %v624 = vpop.f32.mrf.mxu0
        %v625 = vadd.f32 %v311, %v624
        %626 = vmatmul.bf16.gmra.mxu0 %v454
        %v627 = vpop.f32.mrf.mxu0
        %v628 = vadd.f32 %v311, %v627
        %v629 = vpop.f32.mrf.mxu0
        %v630 = vadd.f32 %v311, %v629
        %631 = vmatmul.bf16.gmra.mxu0 %v455
        %v632 = vpop.f32.mrf.mxu0
        %v633 = vadd.f32 %v311, %v632
        %v634 = vpop.f32.mrf.mxu0
        %v635 = vadd.f32 %v311, %v634
        %636 = vmatmul.bf16.gmra.mxu0 %v456
        %v637 = vpop.f32.mrf.mxu0
        %v638 = vadd.f32 %v311, %v637
        %v639 = vpop.f32.mrf.mxu0
        %v640 = vadd.f32 %v311, %v639
        %641 = vmatmul.bf16.gmra.mxu0 %v457
        %v642 = vpop.f32.mrf.mxu0
        %v643 = vadd.f32 %v311, %v642
        %v644 = vpop.f32.mrf.mxu0
        %v645 = vadd.f32 %v311, %v644
        %646 = vmatmul.bf16.gmra.mxu0 %v458
        %v647 = vpop.f32.mrf.mxu0
        %v648 = vadd.f32 %v311, %v647
        %v649 = vpop.f32.mrf.mxu0
        %v650 = vadd.f32 %v311, %v649
        %651 = vmatmul.bf16.gmra.mxu0 %v459
        %v652 = vpop.f32.mrf.mxu0
        %v653 = vadd.f32 %v311, %v652
        %v654 = vpop.f32.mrf.mxu0
        %v655 = vadd.f32 %v311, %v654
        %656 = vmatmul.bf16.gmra.mxu0 %v460
        %v657 = vpop.f32.mrf.mxu0
        %v658 = vadd.f32 %v311, %v657
        %v659 = vpop.f32.mrf.mxu0
        %v660 = vadd.f32 %v311, %v659
        %661 = vmatmul.bf16.gmra.mxu0 %v461
        %v662 = vpop.f32.mrf.mxu0
        %v663 = vadd.f32 %v311, %v662
        %v664 = vpop.f32.mrf.mxu0
        %v665 = vadd.f32 %v311, %v664
        %666 = vmatmul.bf16.gmra.mxu0 %v462
        %v667 = vpop.f32.mrf.mxu0
        %v668 = vadd.f32 %v311, %v667
        %v669 = vpop.f32.mrf.mxu0
        %v670 = vadd.f32 %v311, %v669
        %671 = vmatmul.bf16.gmra.mxu0 %v463
        %v672 = vpop.f32.mrf.mxu0
        %v673 = vadd.f32 %v311, %v672
        %v674 = vpop.f32.mrf.mxu0
        %v675 = vadd.f32 %v311, %v674
        %676 = vmatmul.bf16.gmra.mxu0 %v464
        %v677 = vpop.f32.mrf.mxu0
        %v678 = vadd.f32 %v311, %v677
        %v679 = vpop.f32.mrf.mxu0
        %v680 = vadd.f32 %v311, %v679
        %681 = vmatmul.bf16.gmra.mxu0 %v465
        %v682 = vpop.f32.mrf.mxu0
        %v683 = vadd.f32 %v311, %v682
        %v684 = vpop.f32.mrf.mxu0
        %v685 = vadd.f32 %v311, %v684
        %686 = vmatmul.bf16.gmra.mxu0 %v466
        %v687 = vpop.f32.mrf.mxu0
        %v688 = vadd.f32 %v311, %v687
        %v689 = vpop.f32.mrf.mxu0
        %v690 = vadd.f32 %v311, %v689
        %691 = vmatmul.bf16.gmra.mxu0 %v467
        %v692 = vpop.f32.mrf.mxu0
        %v693 = vadd.f32 %v311, %v692
        %v694 = vpop.f32.mrf.mxu0
        %v695 = vadd.f32 %v311, %v694
        %696 = vmatmul.bf16.gmra.mxu0 %v468
        %v697 = vpop.f32.mrf.mxu0
        %v698 = vadd.f32 %v311, %v697
        %v699 = vpop.f32.mrf.mxu0
        %v700 = vadd.f32 %v311, %v699
        %701 = vmatmul.bf16.gmra.mxu0 %v469
        %v702 = vpop.f32.mrf.mxu0
        %v703 = vadd.f32 %v311, %v702
        %v704 = vpop.f32.mrf.mxu0
        %v705 = vadd.f32 %v311, %v704
        %706 = vmatmul.bf16.gmra.mxu0 %v470
        %v707 = vpop.f32.mrf.mxu0
        %v708 = vadd.f32 %v311, %v707
        %v709 = vpop.f32.mrf.mxu0
        %v710 = vadd.f32 %v311, %v709
        %711 = vmatmul.bf16.gmra.mxu0 %v471
        %v712 = vpop.f32.mrf.mxu0
        %v713 = vadd.f32 %v311, %v712
        %v714 = vpop.f32.mrf.mxu0
        %v715 = vadd.f32 %v311, %v714
        %716 = vmatmul.bf16.gmra.mxu0 %v472
        %v717 = vpop.f32.mrf.mxu0
        %v718 = vadd.f32 %v311, %v717
        %v719 = vpop.f32.mrf.mxu0
        %v720 = vadd.f32 %v311, %v719
        %721 = vdwg.mxu0
        %v722 = vmax.f32 %v563, 0.0
        %v723 = vmax.f32 %v565, 0.0
        %v724 = vmax.f32 %v568, 0.0
        %v725 = vmax.f32 %v570, 0.0
        %v726 = vmax.f32 %v573, 0.0
        %v727 = vmax.f32 %v575, 0.0
        %v728 = vmax.f32 %v578, 0.0
        %v729 = vmax.f32 %v580, 0.0
        %v730 = vmax.f32 %v583, 0.0
        %v731 = vmax.f32 %v585, 0.0
        %v732 = vmax.f32 %v588, 0.0
        %v733 = vmax.f32 %v590, 0.0
        %v734 = vmax.f32 %v593, 0.0
        %v735 = vmax.f32 %v595, 0.0
        %v736 = vmax.f32 %v598, 0.0
        %v737 = vmax.f32 %v600, 0.0
        %v738 = vmax.f32 %v603, 0.0
        %v739 = vmax.f32 %v605, 0.0
        %v740 = vmax.f32 %v608, 0.0
        %v741 = vmax.f32 %v610, 0.0
        %v742 = vmax.f32 %v613, 0.0
        %v743 = vmax.f32 %v615, 0.0
        %v744 = vmax.f32 %v618, 0.0
        %v745 = vmax.f32 %v620, 0.0
        %v746 = vmax.f32 %v623, 0.0
        %v747 = vmax.f32 %v625, 0.0
        %v748 = vmax.f32 %v628, 0.0
        %v749 = vmax.f32 %v630, 0.0
        %v750 = vmax.f32 %v633, 0.0
        %v751 = vmax.f32 %v635, 0.0
        %v752 = vmax.f32 %v638, 0.0
        %v753 = vmax.f32 %v640, 0.0
        %v754 = vmax.f32 %v643, 0.0
        %v755 = vmax.f32 %v645, 0.0
        %v756 = vmax.f32 %v648, 0.0
        %v757 = vmax.f32 %v650, 0.0
        %v758 = vmax.f32 %v653, 0.0
        %v759 = vmax.f32 %v655, 0.0
        %v760 = vmax.f32 %v658, 0.0
        %v761 = vmax.f32 %v660, 0.0
        %v762 = vmax.f32 %v663, 0.0
        %v763 = vmax.f32 %v665, 0.0
        %v764 = vmax.f32 %v668, 0.0
        %v765 = vmax.f32 %v670, 0.0
        %v766 = vmax.f32 %v673, 0.0
        %v767 = vmax.f32 %v675, 0.0
        %v768 = vmax.f32 %v678, 0.0
        %v769 = vmax.f32 %v680, 0.0
        %v770 = vmax.f32 %v683, 0.0
        %v771 = vmax.f32 %v685, 0.0
        %v772 = vmax.f32 %v688, 0.0
        %v773 = vmax.f32 %v690, 0.0
        %v774 = vmax.f32 %v693, 0.0
        %v775 = vmax.f32 %v695, 0.0
        %v776 = vmax.f32 %v698, 0.0
        %v777 = vmax.f32 %v700, 0.0
        %v778 = vmax.f32 %v703, 0.0
        %v779 = vmax.f32 %v705, 0.0
        %v780 = vmax.f32 %v708, 0.0
        %v781 = vmax.f32 %v710, 0.0
        %v782 = vmax.f32 %v713, 0.0
        %v783 = vmax.f32 %v715, 0.0
        %v784 = vmax.f32 %v718, 0.0
        %v785 = vmax.f32 %v720, 0.0
        %786 = vst [vmem:[%s226] sm:$0xff] %v722
        %787 = vst [vmem:[%s226 + $0x8] sm:$0xff] %v723
        %788 = vst [vmem:[%s226 + $0x10] sm:$0xff] %v724
        %789 = vst [vmem:[%s226 + $0x18] sm:$0xff] %v725
        %790 = vst [vmem:[%s226 + $0x20] sm:$0xff] %v726
        %791 = vst [vmem:[%s226 + $0x28] sm:$0xff] %v727
        %792 = vst [vmem:[%s226 + $0x30] sm:$0xff] %v728
        %793 = vst [vmem:[%s226 + $0x38] sm:$0xff] %v729
        %794 = vst [vmem:[%s226 + $0x40] sm:$0xff] %v730
        %795 = vst [vmem:[%s226 + $0x48] sm:$0xff] %v731
        %796 = vst [vmem:[%s226 + $0x50] sm:$0xff] %v732
        %797 = vst [vmem:[%s226 + $0x58] sm:$0xff] %v733
        %798 = vst [vmem:[%s226 + $0x60] sm:$0xff] %v734
        %799 = vst [vmem:[%s226 + $0x68] sm:$0xff] %v735
        %800 = vst [vmem:[%s226 + $0x70] sm:$0xff] %v736
        %801 = vst [vmem:[%s226 + $0x78] sm:$0xff] %v737
        %802 = vst [vmem:[%s226 + $0x80] sm:$0xff] %v738
        %803 = vst [vmem:[%s226 + $0x88] sm:$0xff] %v739
        %804 = vst [vmem:[%s226 + $0x90] sm:$0xff] %v740
        %805 = vst [vmem:[%s226 + $0x98] sm:$0xff] %v741
        %806 = vst [vmem:[%s226 + $0xa0] sm:$0xff] %v742
        %807 = vst [vmem:[%s226 + $0xa8] sm:$0xff] %v743
        %808 = vst [vmem:[%s226 + $0xb0] sm:$0xff] %v744
        %809 = vst [vmem:[%s226 + $0xb8] sm:$0xff] %v745
        %810 = vst [vmem:[%s226 + $0xc0] sm:$0xff] %v746
        %811 = vst [vmem:[%s226 + $0xc8] sm:$0xff] %v747
        %812 = vst [vmem:[%s226 + $0xd0] sm:$0xff] %v748
        %813 = vst [vmem:[%s226 + $0xd8] sm:$0xff] %v749
        %814 = vst [vmem:[%s226 + $0xe0] sm:$0xff] %v750
        %815 = vst [vmem:[%s226 + $0xe8] sm:$0xff] %v751
        %816 = vst [vmem:[%s226 + $0xf0] sm:$0xff] %v752
        %817 = vst [vmem:[%s226 + $0xf8] sm:$0xff] %v753
        %818 = vst [vmem:[%s226 + $0x100] sm:$0xff] %v754
        %819 = vst [vmem:[%s226 + $0x108] sm:$0xff] %v755
        %820 = vst [vmem:[%s226 + $0x110] sm:$0xff] %v756
        %821 = vst [vmem:[%s226 + $0x118] sm:$0xff] %v757
        %822 = vst [vmem:[%s226 + $0x120] sm:$0xff] %v758
        %823 = vst [vmem:[%s226 + $0x128] sm:$0xff] %v759
        %824 = vst [vmem:[%s226 + $0x130] sm:$0xff] %v760
        %825 = vst [vmem:[%s226 + $0x138] sm:$0xff] %v761
        %826 = vst [vmem:[%s226 + $0x140] sm:$0xff] %v762
        %827 = vst [vmem:[%s226 + $0x148] sm:$0xff] %v763
        %828 = vst [vmem:[%s226 + $0x150] sm:$0xff] %v764
        %829 = vst [vmem:[%s226 + $0x158] sm:$0xff] %v765
        %830 = vst [vmem:[%s226 + $0x160] sm:$0xff] %v766
        %831 = vst [vmem:[%s226 + $0x168] sm:$0xff] %v767
        %832 = vst [vmem:[%s226 + $0x170] sm:$0xff] %v768
        %833 = vst [vmem:[%s226 + $0x178] sm:$0xff] %v769
        %834 = vst [vmem:[%s226 + $0x180] sm:$0xff] %v770
        %835 = vst [vmem:[%s226 + $0x188] sm:$0xff] %v771
        %836 = vst [vmem:[%s226 + $0x190] sm:$0xff] %v772
        %837 = vst [vmem:[%s226 + $0x198] sm:$0xff] %v773
        %838 = vst [vmem:[%s226 + $0x1a0] sm:$0xff] %v774
        %839 = vst [vmem:[%s226 + $0x1a8] sm:$0xff] %v775
        %840 = vst [vmem:[%s226 + $0x1b0] sm:$0xff] %v776
        %841 = vst [vmem:[%s226 + $0x1b8] sm:$0xff] %v777
        %842 = vst [vmem:[%s226 + $0x1c0] sm:$0xff] %v778
        %843 = vst [vmem:[%s226 + $0x1c8] sm:$0xff] %v779
        %844 = vst [vmem:[%s226 + $0x1d0] sm:$0xff] %v780
        %845 = vst [vmem:[%s226 + $0x1d8] sm:$0xff] %v781
        %846 = vst [vmem:[%s226 + $0x1e0] sm:$0xff] %v782
        %847 = vst [vmem:[%s226 + $0x1e8] sm:$0xff] %v783
        %848 = vst [vmem:[%s226 + $0x1f0] sm:$0xff] %v784
        %849 = vst [vmem:[%s226 + $0x1f8] sm:$0xff] %v785
        %s850 = sand.u32 %s113, 1
        %s851 = scalar_lea.sflag [#allocation4], %s850
        %s852 = sand.u32 %s113, 1
        %s853 = smul.addr %s852, 512
        %s854 = scalar_lea.vmem [#allocation7], %s853
        // Predicated region
        $region41: #{tpu_custom_call.1} parent=31 // pred_check
          %p855 = pneg %p123
        $region42: #{tpu_custom_call.1} parent=31 // pred_check_branch
          %857 = sbr.rel (%p855) target = $region44
        $region43: #{tpu_custom_call.1} parent=31 // pred_region
          %s858 = smul.u32 8, %s26
          %860 = vsyncadd %s851, 0
          %s861 = smul.addr %s858, 8
          %s862 = smul.addr %s25, 64
          %s863 = sadd.s32 %s861, %s862
          %s864 = smul.addr %s863, 8
          %s865 = scalar_lea.hbm %s3, %s864
          %s866 = sshll.u32 %s854, 4
          %s867 = int_to_ptr.vmem [resolvable:$true] %s866
          %s868 = sshll.u32 %s865, 4
          %s869 = int_to_ptr.hbm [resolvable:$true] %s868
          %874 = dma.vmem_to_hbm [thread:$0]  %s867, 8192, %s869, %s851, 128, 128, 8
        $region44: #{tpu_custom_call.1} parent=31 // pred_fallthru
          _
      $region32: #{tpu_custom_call.1} parent=5 // pred_fallthru
        _
      %p875 = scmp.le.s32.totalorder 2, %s16
      // Predicated region
      $region45: #{tpu_custom_call.1} parent=5 // pred_check
        %p876 = pneg %p875
      $region46: #{tpu_custom_call.1} parent=5 // pred_check_branch
        %878 = sbr.rel (%p876) target = $region48
      $region47: #{tpu_custom_call.1} parent=5 // pred_region
        %s879 = ssub.s32 %s16, 2
        // Predicated region
        $region49: #{tpu_custom_call.1} parent=47 // pred_check
          %p880 = pneg %p129
        $region50: #{tpu_custom_call.1} parent=47 // pred_check_branch
          %882 = sbr.rel (%p880) target = $region52
        $region51: #{tpu_custom_call.1} parent=47 // pred_region
          %s883 = sand.u32 %s114, 1
          %s884 = scalar_lea.sflag [#allocation4], %s883
          %s885 = sand.u32 %s114, 1
          %s886 = smul.addr %s885, 512
          %s887 = scalar_lea.vmem [#allocation7], %s886
          %889 = dma.done %s884, 8192
        $region52: #{tpu_custom_call.1} parent=47 // pred_fallthru
          _
      $region48: #{tpu_custom_call.1} parent=5 // pred_fallthru
        _
    $region6: #{tpu_custom_call.1} parent=1 // loop_footer
      %s20 = sadd.s32 1, %s16
    $region7: #{tpu_custom_call.1} parent=1 // loop_footer_branch
      %15 = sbr.rel target = $region3
    $region8: #{tpu_custom_call.1} parent=1 // loop_exit
      _
    %890 = vsyncpa [#allocation3], 1
    %s891 = scalar_lea.sflag [#allocation3], 1
    %892 = vsyncpa %s891, 1
    %893 = vsyncpa [#allocation6], 1
    %894 = vsyncpa [#allocation4], 1
    %s895 = scalar_lea.sflag [#allocation4], 1
    %896 = vsyncpa %s895, 1

</llo_original>
